<compile_context>
chip_gen: v7x
topology: tpu7x:2x2x1
jax: 0.10.0
libtpu: 0.0.40
codegen_flags: <defaults>
</compile_context>

<pallas_src>
import math

import jax
import jax.numpy as jnp
from jax.experimental import pallas as pl
from jax.experimental.pallas import tpu as pltpu

# dist_price.shape[1] = (259 - 1) * 2 = 516 in the reference preprocessing.
IN_FEATURES = 516
HIDDEN = 15
OUT_FEATURES = 1

# Max batch tile (rows). Multiple of 16; sized so double-buffered f32 x blocks
# plus in-kernel temporaries fit a 48 MiB scoped VMEM limit (v7x-safe).
_TB_MAX = 4096
_VMEM_LIMIT_BYTES = 48 * 1024 * 1024

# On v7x, consider (pltpu.CORE_PARALLEL,) to guarantee both TensorCores are
# used; "parallel" is kept here because it compiles cleanly on every
# generation (no-op on single-TC v5e/v6e).
_DIM_SEMANTICS = ("parallel",)


def _round_up(n, m):
    return ((n + m - 1) // m) * m


def mlp_kernel(x_ref,
               w1_ref, b1_ref,
               w2_ref, b2_ref,
               w3_ref, b3_ref,
               w4_ref, b4_ref,
               o_ref):
    # Cast the streamed f32 tile to bf16 in-kernel (MXU-native operands); all
    # accumulation, bias adds and ReLUs stay f32.
    x = x_ref[...].astype(jnp.bfloat16)

    # Layer 1: Linear(516, 15) + ReLU  -- dominates FLOPs and HBM bytes.
    h = jnp.dot(x, w1_ref[...], preferred_element_type=jnp.float32) + b1_ref[...]
    h = jnp.maximum(h, 0.0)

    # Layers 2-3: Linear(15, 15) + ReLU.  bf16 operands: K=N=15 pads to a full
    # MXU tile, so f32 here costs several extra MXU passes per tile.
    h = jnp.dot(h.astype(jnp.bfloat16), w2_ref[...],
                preferred_element_type=jnp.float32) + b2_ref[...]
    h = jnp.maximum(h, 0.0)

    h = jnp.dot(h.astype(jnp.bfloat16), w3_ref[...],
                preferred_element_type=jnp.float32) + b3_ref[...]
    h = jnp.maximum(h, 0.0)

    # Layer 4: Linear(15, 1), no activation.
    out = jnp.dot(h.astype(jnp.bfloat16), w4_ref[...],
                  preferred_element_type=jnp.float32) + b4_ref[...]
    o_ref[...] = out.astype(o_ref.dtype)


def _forward_tiles(x_arr, weights, biases, tb, n_tiles):
    """One pallas_call over `n_tiles` complete batch tiles of `tb` rows.

    x_arr may have MORE than n_tiles*tb rows; the grid simply never touches the
    trailing rows (no slicing/copy of the big activation array needed)."""
    w1, w2, w3, w4 = weights
    b1, b2, b3, b4 = biases

    def resident(shape):
        # Full-array block + constant index_map -> stays in VMEM across steps.
        return pl.BlockSpec(shape, lambda i: (0,) * len(shape))

    in_specs = [
        pl.BlockSpec((tb, IN_FEATURES), lambda i: (i, 0)),              # x (streamed, f32)
        resident((IN_FEATURES, HIDDEN)),  resident((1, HIDDEN)),        # w1, b1
        resident((HIDDEN, HIDDEN)),       resident((1, HIDDEN)),        # w2, b2
        resident((HIDDEN, HIDDEN)),       resident((1, HIDDEN)),        # w3, b3
        resident((HIDDEN, OUT_FEATURES)), resident((1, OUT_FEATURES)),  # w4, b4
    ]
    out_spec = pl.BlockSpec((tb, OUT_FEATURES), lambda i: (i, 0))

    return pl.pallas_call(
        mlp_kernel,
        out_shape=jax.ShapeDtypeStruct((n_tiles * tb, OUT_FEATURES), jnp.float32),
        grid=(n_tiles,),
        in_specs=in_specs,
        out_specs=out_spec,
        compiler_params=pltpu.CompilerParams(
            dimension_semantics=_DIM_SEMANTICS,
            vmem_limit_bytes=_VMEM_LIMIT_BYTES,
        ),
    )(x_arr, w1, b1, w2, b2, w3, b3, w4, b4)


def nft_price_predictor(x, params, *, tb_max=_TB_MAX):
    """Forward pass of the MLP.

    x: [B, IN_FEATURES] float32
    params: dict of f32 weights [in, out] and biases [1, out]
    returns: [B, OUT_FEATURES] float32
    """
    B = x.shape[0]
    assert x.shape[1] == IN_FEATURES, x.shape

    # Weights are tiny (~16 KB): pre-cast to bf16 once, outside the kernel.
    weights = tuple(params[f"w{i}"].astype(jnp.bfloat16) for i in range(1, 5))
    biases = tuple(params[f"b{i}"] for i in range(1, 5))

    # Batch tile: multiple of 16, capped at tb_max.
    tb = min(tb_max, _round_up(max(B, 1), 16))
    n_full = B // tb
    b_main = n_full * tb
    rem = B - b_main

    outs = []
    if n_full:
        # Main part: complete tiles, streamed straight out of the original x.
        outs.append(_forward_tiles(x, weights, biases, tb, n_full))
    if rem:
        # Ragged tail: pad only the leftover rows up to a multiple of 16 and
        # run a single small tile (instead of padding B up to a whole tb tile).
        tail_rows = _round_up(rem, 16)
        x_tail = x[b_main:]
        if tail_rows != rem:
            x_tail = jnp.pad(x_tail, ((0, tail_rows - rem), (0, 0)))
        outs.append(_forward_tiles(x_tail, weights, biases, tail_rows, 1)[:rem])

    return outs[0] if len(outs) == 1 else jnp.concatenate(outs, axis=0)


def init_params(key):
    """PyTorch nn.Linear default init: U(-1/sqrt(fan_in), 1/sqrt(fan_in)) for
    weights and biases.  Weights stored as [in, out] so the kernel computes
    y = x @ W + b (== x @ W.T + b for PyTorch's [out, in] W)."""
    dims = [(IN_FEATURES, HIDDEN), (HIDDEN, HIDDEN), (HIDDEN, HIDDEN),
            (HIDDEN, OUT_FEATURES)]
    params = {}
    for i, (fan_in, fan_out) in enumerate(dims, start=1):
        key, kw, kb = jax.random.split(key, 3)
        bound = 1.0 / math.sqrt(fan_in)
        params[f"w{i}"] = jax.random.uniform(
            kw, (fan_in, fan_out), jnp.float32, minval=-bound, maxval=bound)
        params[f"b{i}"] = jax.random.uniform(
            kb, (1, fan_out), jnp.float32, minval=-bound, maxval=bound)
    return params


def reference_forward_matched(x, params):
    """Pure-JAX reference mirroring the kernel's dtype choices (bf16 matmul
    operands, f32 accumulation / bias / ReLU)."""
    h = x
    for i in range(1, 4):
        h = jnp.dot(h.astype(jnp.bfloat16), params[f"w{i}"].astype(jnp.bfloat16),
                    preferred_element_type=jnp.float32) + params[f"b{i}"]
        h = jnp.maximum(h, 0.0)
    return jnp.dot(h.astype(jnp.bfloat16), params["w4"].astype(jnp.bfloat16),
                   preferred_element_type=jnp.float32) + params["b4"]


def reference_forward_f32(x, params):
    """True full-f32 reference (matches the PyTorch module numerically)."""
    hp = jax.lax.Precision.HIGHEST
    h = x
    for i in range(1, 4):
        h = jnp.maximum(
            jnp.dot(h, params[f"w{i}"], precision=hp) + params[f"b{i}"], 0.0)
    return jnp.dot(h, params["w4"], precision=hp) + params["b4"]


if __name__ == "__main__":
    key = jax.random.PRNGKey(0)
    key, kx = jax.random.split(key)
    params = init_params(key)

    # Small demo shape; batch=10 exercises the ragged (tail-only) path.
    batch = 10
    x = jax.random.normal(kx, (batch, IN_FEATURES), dtype=jnp.float32)

    out = jax.block_until_ready(nft_price_predictor(x, params))
    assert out.shape == (batch, OUT_FEATURES), out.shape

    ref_m = reference_forward_matched(x, params)
    ref_f = reference_forward_f32(x, params)
    err_m = float(jnp.max(jnp.abs(out - ref_m)))
    err_f = float(jnp.max(jnp.abs(out - ref_f)))
    assert jnp.allclose(out, ref_m, atol=5e-3, rtol=5e-3), err_m   # kernel vs matched-precision ref
    assert jnp.allclose(out, ref_f, atol=5e-2, rtol=5e-2), err_f   # kernel vs true f32 model

    # Exercise the multi-tile grid + ragged-tail call at a small scale.
    key, kx2 = jax.random.split(key)
    x2 = jax.random.normal(kx2, (50, IN_FEATURES), dtype=jnp.float32)
    out2 = jax.block_until_ready(nft_price_predictor(x2, params, tb_max=16))
    assert out2.shape == (50, OUT_FEATURES), out2.shape
    ref2 = reference_forward_matched(x2, params)
    assert jnp.allclose(out2, ref2, atol=5e-3, rtol=5e-3), \
        float(jnp.max(jnp.abs(out2 - ref2)))

    print("KERNEL_OK")
</pallas_src>

<mosaic_0001>
module attributes {stable_mosaic.version = 11 : i64} {
  func.func @mlp_kernel(%arg0: i32, %arg1: memref<16x516xf32, #tpu.memory_space<vmem>>, %arg2: memref<516x15xbf16, #tpu.memory_space<vmem>>, %arg3: memref<1x15xf32, #tpu.memory_space<vmem>>, %arg4: memref<15x15xbf16, #tpu.memory_space<vmem>>, %arg5: memref<1x15xf32, #tpu.memory_space<vmem>>, %arg6: memref<15x15xbf16, #tpu.memory_space<vmem>>, %arg7: memref<1x15xf32, #tpu.memory_space<vmem>>, %arg8: memref<15x1xbf16, #tpu.memory_space<vmem>>, %arg9: memref<1x1xf32, #tpu.memory_space<vmem>>, %arg10: memref<16x1xf32, #tpu.memory_space<vmem>>) attributes {dimension_semantics = [#tpu.dimension_semantics<parallel>], iteration_bounds = array<i64: 1>, scalar_prefetch = 0 : i64, scratch_operands = 0 : i64, tpu.core_type = #tpu.core_type<tc>, window_params = [{transform_indices = @transform_0, window_bounds = array<i64: 16, 516>}, {pipeline_mode = #tpu.pipeline_mode<synchronous>, transform_indices = @transform_1, window_bounds = array<i64: 516, 15>}, {pipeline_mode = #tpu.pipeline_mode<synchronous>, transform_indices = @transform_2, window_bounds = array<i64: 1, 15>}, {pipeline_mode = #tpu.pipeline_mode<synchronous>, transform_indices = @transform_3, window_bounds = array<i64: 15, 15>}, {pipeline_mode = #tpu.pipeline_mode<synchronous>, transform_indices = @transform_4, window_bounds = array<i64: 1, 15>}, {pipeline_mode = #tpu.pipeline_mode<synchronous>, transform_indices = @transform_5, window_bounds = array<i64: 15, 15>}, {pipeline_mode = #tpu.pipeline_mode<synchronous>, transform_indices = @transform_6, window_bounds = array<i64: 1, 15>}, {pipeline_mode = #tpu.pipeline_mode<synchronous>, transform_indices = @transform_7, window_bounds = array<i64: 15, 1>}, {pipeline_mode = #tpu.pipeline_mode<synchronous>, transform_indices = @transform_8, window_bounds = array<i64: 1, 1>}, {transform_indices = @transform_9, window_bounds = array<i64: 16, 1>}]} {
    %c0 = arith.constant 0 : index
    %c0_0 = arith.constant 0 : index
    %0 = vector.load %arg1[%c0, %c0_0] : memref<16x516xf32, #tpu.memory_space<vmem>>, vector<16x516xf32>
    %1 = arith.truncf %0 : vector<16x516xf32> to vector<16x516xbf16>
    %c0_1 = arith.constant 0 : index
    %c0_2 = arith.constant 0 : index
    %2 = vector.load %arg2[%c0_1, %c0_2] : memref<516x15xbf16, #tpu.memory_space<vmem>>, vector<516x15xbf16>
    %cst = arith.constant dense<0.000000e+00> : vector<16x15xf32>
    %3 = tpu.matmul %1, %2, %cst {dimension_numbers = #tpu.dot_dimension_numbers<[1], [0], [0], [1], [0, 0, 1, 1], [], []>} : vector<16x516xbf16>, vector<516x15xbf16>, vector<16x15xf32> -> vector<16x15xf32>
    %c0_3 = arith.constant 0 : index
    %c0_4 = arith.constant 0 : index
    %4 = vector.load %arg3[%c0_3, %c0_4] : memref<1x15xf32, #tpu.memory_space<vmem>>, vector<1x15xf32>
    %5 = vector.broadcast %4 : vector<1x15xf32> to vector<16x15xf32>
    %6 = arith.addf %3, %5 : vector<16x15xf32>
    %cst_5 = arith.constant 0.000000e+00 : f32
    %7 = vector.broadcast %cst_5 : f32 to vector<16x15xf32>
    %8 = arith.maximumf %6, %7 : vector<16x15xf32>
    %9 = arith.truncf %8 : vector<16x15xf32> to vector<16x15xbf16>
    %c0_6 = arith.constant 0 : index
    %c0_7 = arith.constant 0 : index
    %10 = vector.load %arg4[%c0_6, %c0_7] : memref<15x15xbf16, #tpu.memory_space<vmem>>, vector<15x15xbf16>
    %cst_8 = arith.constant dense<0.000000e+00> : vector<16x15xf32>
    %11 = tpu.matmul %9, %10, %cst_8 {dimension_numbers = #tpu.dot_dimension_numbers<[1], [0], [0], [1], [0, 0, 1, 1], [], []>} : vector<16x15xbf16>, vector<15x15xbf16>, vector<16x15xf32> -> vector<16x15xf32>
    %c0_9 = arith.constant 0 : index
    %c0_10 = arith.constant 0 : index
    %12 = vector.load %arg5[%c0_9, %c0_10] : memref<1x15xf32, #tpu.memory_space<vmem>>, vector<1x15xf32>
    %13 = vector.broadcast %12 : vector<1x15xf32> to vector<16x15xf32>
    %14 = arith.addf %11, %13 : vector<16x15xf32>
    %cst_11 = arith.constant 0.000000e+00 : f32
    %15 = vector.broadcast %cst_11 : f32 to vector<16x15xf32>
    %16 = arith.maximumf %14, %15 : vector<16x15xf32>
    %17 = arith.truncf %16 : vector<16x15xf32> to vector<16x15xbf16>
    %c0_12 = arith.constant 0 : index
    %c0_13 = arith.constant 0 : index
    %18 = vector.load %arg6[%c0_12, %c0_13] : memref<15x15xbf16, #tpu.memory_space<vmem>>, vector<15x15xbf16>
    %cst_14 = arith.constant dense<0.000000e+00> : vector<16x15xf32>
    %19 = tpu.matmul %17, %18, %cst_14 {dimension_numbers = #tpu.dot_dimension_numbers<[1], [0], [0], [1], [0, 0, 1, 1], [], []>} : vector<16x15xbf16>, vector<15x15xbf16>, vector<16x15xf32> -> vector<16x15xf32>
    %c0_15 = arith.constant 0 : index
    %c0_16 = arith.constant 0 : index
    %20 = vector.load %arg7[%c0_15, %c0_16] : memref<1x15xf32, #tpu.memory_space<vmem>>, vector<1x15xf32>
    %21 = vector.broadcast %20 : vector<1x15xf32> to vector<16x15xf32>
    %22 = arith.addf %19, %21 : vector<16x15xf32>
    %cst_17 = arith.constant 0.000000e+00 : f32
    %23 = vector.broadcast %cst_17 : f32 to vector<16x15xf32>
    %24 = arith.maximumf %22, %23 : vector<16x15xf32>
    %25 = arith.truncf %24 : vector<16x15xf32> to vector<16x15xbf16>
    %c0_18 = arith.constant 0 : index
    %c0_19 = arith.constant 0 : index
    %26 = vector.load %arg8[%c0_18, %c0_19] : memref<15x1xbf16, #tpu.memory_space<vmem>>, vector<15x1xbf16>
    %cst_20 = arith.constant dense<0.000000e+00> : vector<16x1xf32>
    %27 = tpu.matmul %25, %26, %cst_20 {dimension_numbers = #tpu.dot_dimension_numbers<[1], [0], [0], [1], [0, 0, 1, 1], [], []>} : vector<16x15xbf16>, vector<15x1xbf16>, vector<16x1xf32> -> vector<16x1xf32>
    %c0_21 = arith.constant 0 : index
    %c0_22 = arith.constant 0 : index
    %28 = vector.load %arg9[%c0_21, %c0_22] : memref<1x1xf32, #tpu.memory_space<vmem>>, vector<1x1xf32>
    %29 = vector.broadcast %28 : vector<1x1xf32> to vector<16x1xf32>
    %30 = arith.addf %27, %29 : vector<16x1xf32>
    %c0_23 = arith.constant 0 : index
    %c0_24 = arith.constant 0 : index
    %31 = vector.load %arg10[%c0_23, %c0_24] : memref<16x1xf32, #tpu.memory_space<vmem>>, vector<16x1xf32>
    tpu.vector_store %arg10[%c0_23, %c0_24], %30 {strides = array<i32>} : memref<16x1xf32, #tpu.memory_space<vmem>>, vector<16x1xf32>,
    return
  }
  func.func @transform_0(%arg0: i32) -> (i32, i32) {
    %c0_i32 = arith.constant 0 : i32
    %c0_i32_0 = arith.constant 0 : i32
    return %arg0, %c0_i32 : i32, i32
  }
  func.func @transform_1(%arg0: i32) -> (i32, i32) {
    %c0_i32 = arith.constant 0 : i32
    %c0_i32_0 = arith.constant 0 : i32
    %c0_i32_1 = arith.constant 0 : i32
    return %c0_i32, %c0_i32_0 : i32, i32
  }
  func.func @transform_2(%arg0: i32) -> (i32, i32) {
    %c0_i32 = arith.constant 0 : i32
    %c0_i32_0 = arith.constant 0 : i32
    %c0_i32_1 = arith.constant 0 : i32
    return %c0_i32, %c0_i32_0 : i32, i32
  }
  func.func @transform_3(%arg0: i32) -> (i32, i32) {
    %c0_i32 = arith.constant 0 : i32
    %c0_i32_0 = arith.constant 0 : i32
    %c0_i32_1 = arith.constant 0 : i32
    return %c0_i32, %c0_i32_0 : i32, i32
  }
  func.func @transform_4(%arg0: i32) -> (i32, i32) {
    %c0_i32 = arith.constant 0 : i32
    %c0_i32_0 = arith.constant 0 : i32
    %c0_i32_1 = arith.constant 0 : i32
    return %c0_i32, %c0_i32_0 : i32, i32
  }
  func.func @transform_5(%arg0: i32) -> (i32, i32) {
    %c0_i32 = arith.constant 0 : i32
    %c0_i32_0 = arith.constant 0 : i32
    %c0_i32_1 = arith.constant 0 : i32
    return %c0_i32, %c0_i32_0 : i32, i32
  }
  func.func @transform_6(%arg0: i32) -> (i32, i32) {
    %c0_i32 = arith.constant 0 : i32
    %c0_i32_0 = arith.constant 0 : i32
    %c0_i32_1 = arith.constant 0 : i32
    return %c0_i32, %c0_i32_0 : i32, i32
  }
  func.func @transform_7(%arg0: i32) -> (i32, i32) {
    %c0_i32 = arith.constant 0 : i32
    %c0_i32_0 = arith.constant 0 : i32
    %c0_i32_1 = arith.constant 0 : i32
    return %c0_i32, %c0_i32_0 : i32, i32
  }
  func.func @transform_8(%arg0: i32) -> (i32, i32) {
    %c0_i32 = arith.constant 0 : i32
    %c0_i32_0 = arith.constant 0 : i32
    %c0_i32_1 = arith.constant 0 : i32
    return %c0_i32, %c0_i32_0 : i32, i32
  }
  func.func @transform_9(%arg0: i32) -> (i32, i32) {
    %c0_i32 = arith.constant 0 : i32
    %c0_i32_0 = arith.constant 0 : i32
    return %arg0, %c0_i32 : i32, i32
  }
}

</mosaic_0001>

<llo_original>
// kernel: tpu_custom_call.1
$region0: #{tpu_custom_call.1}
  #allocation0 [shape = 'u32[]', space=smem, size = 0x4, offset = 0x4, fixed_abs, tag = 'smem constant byte address 0x4 - core index']
  #allocation1 [shape = 'u32[144,128]{1,0:T(1,128)}', space=vmem, size = 0x12000, scoped, tag = 'internal scratch']
  #allocation2 [shape = 'f32[1,1]{1,0:T(1,128)S(1)}', space=vmem, size = 0x200, scoped, tag = 'scoped memory for tpu_custom_call.1']
  %s0 = inlined_call_operand.vmem [shape: f32[16,516], index: 0, kind: input, shape index: {}]
  %s1 = inlined_call_operand.vmem [shape: bf16[516,15], index: 1, kind: input, shape index: {}]
  %s2 = inlined_call_operand.vmem [shape: f32[1,15], index: 2, kind: input, shape index: {}]
  %s3 = inlined_call_operand.vmem [shape: bf16[15,15], index: 3, kind: input, shape index: {}]
  %s4 = inlined_call_operand.vmem [shape: f32[1,15], index: 4, kind: input, shape index: {}]
  %s5 = inlined_call_operand.vmem [shape: bf16[15,15], index: 5, kind: input, shape index: {}]
  %s6 = inlined_call_operand.vmem [shape: f32[1,15], index: 6, kind: input, shape index: {}]
  %s7 = inlined_call_operand.vmem [shape: bf16[15,1], index: 7, kind: input, shape index: {}]
  %s8 = inlined_call_operand.<no memory space> [shape: f32[1,1], index: 8, kind: input, shape index: {}]
  %s9 = inlined_call_operand.vmem [shape: f32[16,1], index: 9, kind: output, shape index: {}]
  %s10 = sld [smem:[#allocation0]]
  $region46: #{tpu_custom_call.1} parent=0
    _
  %s12 = ssub.s32 1, %s10
  %s13 = scalar_select 0, %s12, %s10
  %v14 = vstv %s8
  %15 = vst [vmem:[#allocation2] sm:$0x1] %v14
  // Predicated region
  $region2: #{tpu_custom_call.1} parent=0 // pred_check
    _
  $region3: #{tpu_custom_call.1} parent=0 // pred_check_branch
    %17 = sbr.rel (0) target = $region5
  $region4: #{tpu_custom_call.1} parent=0 // pred_region
    _
  $region5: #{tpu_custom_call.1} parent=0 // pred_fallthru
    _
  // Predicated region
  $region6: #{tpu_custom_call.1} parent=0 // pred_check
    _
  $region7: #{tpu_custom_call.1} parent=0 // pred_check_branch
    %19 = sbr.rel (0) target = $region9
  $region8: #{tpu_custom_call.1} parent=0 // pred_region
    _
  $region9: #{tpu_custom_call.1} parent=0 // pred_fallthru
    _
  // Predicated region
  $region10: #{tpu_custom_call.1} parent=0 // pred_check
    _
  $region11: #{tpu_custom_call.1} parent=0 // pred_check_branch
    %21 = sbr.rel (0) target = $region13
  $region12: #{tpu_custom_call.1} parent=0 // pred_region
    _
  $region13: #{tpu_custom_call.1} parent=0 // pred_fallthru
    _
  // Predicated region
  $region14: #{tpu_custom_call.1} parent=0 // pred_check
    _
  $region15: #{tpu_custom_call.1} parent=0 // pred_check_branch
    %23 = sbr.rel (0) target = $region17
  $region16: #{tpu_custom_call.1} parent=0 // pred_region
    _
  $region17: #{tpu_custom_call.1} parent=0 // pred_fallthru
    _
  // Predicated region
  $region18: #{tpu_custom_call.1} parent=0 // pred_check
    _
  $region19: #{tpu_custom_call.1} parent=0 // pred_check_branch
    %25 = sbr.rel (0) target = $region21
  $region20: #{tpu_custom_call.1} parent=0 // pred_region
    _
  $region21: #{tpu_custom_call.1} parent=0 // pred_fallthru
    _
  // Predicated region
  $region22: #{tpu_custom_call.1} parent=0 // pred_check
    _
  $region23: #{tpu_custom_call.1} parent=0 // pred_check_branch
    %27 = sbr.rel (0) target = $region25
  $region24: #{tpu_custom_call.1} parent=0 // pred_region
    _
  $region25: #{tpu_custom_call.1} parent=0 // pred_fallthru
    _
  // Predicated region
  $region26: #{tpu_custom_call.1} parent=0 // pred_check
    _
  $region27: #{tpu_custom_call.1} parent=0 // pred_check_branch
    %29 = sbr.rel (0) target = $region29
  $region28: #{tpu_custom_call.1} parent=0 // pred_region
    _
  $region29: #{tpu_custom_call.1} parent=0 // pred_fallthru
    _
  // Predicated region
  $region30: #{tpu_custom_call.1} parent=0 // pred_check
    _
  $region31: #{tpu_custom_call.1} parent=0 // pred_check_branch
    %31 = sbr.rel (0) target = $region33
  $region32: #{tpu_custom_call.1} parent=0 // pred_region
    _
  $region33: #{tpu_custom_call.1} parent=0 // pred_fallthru
    _
  // Predicated region
  $region34: #{tpu_custom_call.1} parent=0 // pred_check
    _
  $region35: #{tpu_custom_call.1} parent=0 // pred_check_branch
    %33 = sbr.rel (0) target = $region37
  $region36: #{tpu_custom_call.1} parent=0 // pred_region
    _
  $region37: #{tpu_custom_call.1} parent=0 // pred_fallthru
    _
  %v35 = vld [vmem:[%s0] sm:$0xff]
  %v36 = vld [vmem:[%s0 + $0x8] sm:$0xff]
  %v37 = vld [vmem:[%s0 + $0x10] sm:$0xff]
  %v38 = vld [vmem:[%s0 + $0x18] sm:$0xff]
  %v39 = vld [vmem:[%s0 + $0x20] sm:$0xff]
  %v40 = vld [vmem:[%s0 + $0x28] sm:$0xff]
  %v41 = vld [vmem:[%s0 + $0x30] sm:$0xff]
  %v42 = vld [vmem:[%s0 + $0x38] sm:$0xff]
  %v43 = vld [vmem:[%s0 + $0x40] sm:$0xff]
  %v44 = vld [vmem:[%s0 + $0x48] sm:$0xff]
  %v45 = vpack.c.bf16 %v40, %v35
  %v46 = vpack.c.bf16 %v41, %v36
  %v47 = vpack.c.bf16 %v42, %v37
  %v48 = vpack.c.bf16 %v43, %v38
  %v49 = vpack.c.bf16 %v44, %v39
  %v50 = vld [vmem:[%s1] sm:$0xf]
  %v51 = vld [vmem:[%s1 + $0x4] sm:$0xf]
  %v52 = vld [vmem:[%s1 + $0x8] sm:$0xf]
  %v53 = vld [vmem:[%s1 + $0xc] sm:$0xf]
  %v54 = vld [vmem:[%s1 + $0x10] sm:$0xf]
  %v55 = vld [vmem:[%s1 + $0x14] sm:$0xf]
  %v56 = vld [vmem:[%s1 + $0x18] sm:$0xf]
  %v57 = vld [vmem:[%s1 + $0x1c] sm:$0xf]
  %v58 = vld [vmem:[%s1 + $0x20] sm:$0xf]
  %v59 = vld [vmem:[%s1 + $0x24] sm:$0xf]
  %v60 = vld [vmem:[%s1 + $0x28] sm:$0xf]
  %v61 = vld [vmem:[%s1 + $0x2c] sm:$0xf]
  %v62 = vld [vmem:[%s1 + $0x30] sm:$0xf]
  %v63 = vld [vmem:[%s1 + $0x34] sm:$0xf]
  %v64 = vld [vmem:[%s1 + $0x38] sm:$0xf]
  %v65 = vld [vmem:[%s1 + $0x3c] sm:$0xf]
  %v66 = vld [vmem:[%s1 + $0x40] sm:$0xf]
  %v67 = vld [vmem:[%s1 + $0x44] sm:$0xf]
  %v68 = vld [vmem:[%s1 + $0x48] sm:$0xf]
  %v69 = vld [vmem:[%s1 + $0x4c] sm:$0xf]
  %v70 = vld [vmem:[%s1 + $0x50] sm:$0xf]
  %v71 = vld [vmem:[%s1 + $0x54] sm:$0xf]
  %v72 = vld [vmem:[%s1 + $0x58] sm:$0xf]
  %v73 = vld [vmem:[%s1 + $0x5c] sm:$0xf]
  %v74 = vld [vmem:[%s1 + $0x60] sm:$0xf]
  %v75 = vld [vmem:[%s1 + $0x64] sm:$0xf]
  %v76 = vld [vmem:[%s1 + $0x68] sm:$0xf]
  %v77 = vld [vmem:[%s1 + $0x6c] sm:$0xf]
  %v78 = vld [vmem:[%s1 + $0x70] sm:$0xf]
  %v79 = vld [vmem:[%s1 + $0x74] sm:$0xf]
  %v80 = vld [vmem:[%s1 + $0x78] sm:$0xf]
  %v81 = vld [vmem:[%s1 + $0x7c] sm:$0xf]
  %v82 = vld [vmem:[%s1 + $0x80] sm:$0xf]
  %v83 = vld [vmem:[%s1 + $0x84] sm:$0xf]
  %v84 = vld [vmem:[%s1 + $0x88] sm:$0xf]
  %v85 = vld [vmem:[%s1 + $0x8c] sm:$0xf]
  %v86 = vld [vmem:[%s1 + $0x90] sm:$0xf]
  %v87 = vld [vmem:[%s1 + $0x94] sm:$0xf]
  %v88 = vld [vmem:[%s1 + $0x98] sm:$0xf]
  %v89 = vld [vmem:[%s1 + $0x9c] sm:$0xf]
  %v90 = vld [vmem:[%s1 + $0xa0] sm:$0xf]
  %v91 = vld [vmem:[%s1 + $0xa4] sm:$0xf]
  %v92 = vld [vmem:[%s1 + $0xa8] sm:$0xf]
  %v93 = vld [vmem:[%s1 + $0xac] sm:$0xf]
  %v94 = vld [vmem:[%s1 + $0xb0] sm:$0xf]
  %v95 = vld [vmem:[%s1 + $0xb4] sm:$0xf]
  %v96 = vld [vmem:[%s1 + $0xb8] sm:$0xf]
  %v97 = vld [vmem:[%s1 + $0xbc] sm:$0xf]
  %v98 = vld [vmem:[%s1 + $0xc0] sm:$0xf]
  %v99 = vld [vmem:[%s1 + $0xc4] sm:$0xf]
  %v100 = vld [vmem:[%s1 + $0xc8] sm:$0xf]
  %v101 = vld [vmem:[%s1 + $0xcc] sm:$0xf]
  %v102 = vld [vmem:[%s1 + $0xd0] sm:$0xf]
  %v103 = vld [vmem:[%s1 + $0xd4] sm:$0xf]
  %v104 = vld [vmem:[%s1 + $0xd8] sm:$0xf]
  %v105 = vld [vmem:[%s1 + $0xdc] sm:$0xf]
  %v106 = vld [vmem:[%s1 + $0xe0] sm:$0xf]
  %v107 = vld [vmem:[%s1 + $0xe4] sm:$0xf]
  %v108 = vld [vmem:[%s1 + $0xe8] sm:$0xf]
  %v109 = vld [vmem:[%s1 + $0xec] sm:$0xf]
  %v110 = vld [vmem:[%s1 + $0xf0] sm:$0xf]
  %v111 = vld [vmem:[%s1 + $0xf4] sm:$0xf]
  %v112 = vld [vmem:[%s1 + $0xf8] sm:$0xf]
  %v113 = vld [vmem:[%s1 + $0xfc] sm:$0xf]
  %v114 = vld [vmem:[%s1 + $0x100] sm:$0x3]
  %v115 = vld [vmem:[%s2] sm:$0x1]
  %v117 = vlaneseq
  %v118 = vshrl.u32 %v117, 7
  %v119 = vsub.s32 0, %v118
  %v120 = vrot.slane %v115, %v119
  %v187 = vunpack.c.l.b16 %v50
  %v188 = vunpack.c.l.b16 %v51
  %v189 = vunpack.c.l.b16 %v52
  %v190 = vunpack.c.l.b16 %v53
  %v191 = vunpack.c.l.b16 %v54
  %v192 = vunpack.c.l.b16 %v55
  %v193 = vunpack.c.l.b16 %v56
  %v194 = vunpack.c.l.b16 %v57
  %v195 = vunpack.c.l.b16 %v58
  %v196 = vunpack.c.l.b16 %v59
  %v197 = vunpack.c.l.b16 %v60
  %v198 = vunpack.c.l.b16 %v61
  %v199 = vunpack.c.l.b16 %v62
  %v200 = vunpack.c.l.b16 %v63
  %v201 = vunpack.c.l.b16 %v64
  %v202 = vunpack.c.l.b16 %v65
  %v203 = vunpack.c.l.b16 %v66
  %v204 = vunpack.c.l.b16 %v67
  %v205 = vunpack.c.l.b16 %v68
  %v206 = vunpack.c.l.b16 %v69
  %v207 = vunpack.c.l.b16 %v70
  %v208 = vunpack.c.l.b16 %v71
  %v209 = vunpack.c.l.b16 %v72
  %v210 = vunpack.c.l.b16 %v73
  %v211 = vunpack.c.l.b16 %v74
  %v212 = vunpack.c.l.b16 %v75
  %v213 = vunpack.c.l.b16 %v76
  %v214 = vunpack.c.l.b16 %v77
  %v215 = vunpack.c.l.b16 %v78
  %v216 = vunpack.c.l.b16 %v79
  %v217 = vunpack.c.l.b16 %v80
  %v218 = vunpack.c.l.b16 %v81
  %v219 = vunpack.c.l.b16 %v82
  %v220 = vunpack.c.l.b16 %v83
  %v221 = vunpack.c.l.b16 %v84
  %v222 = vunpack.c.l.b16 %v85
  %v223 = vunpack.c.l.b16 %v86
  %v224 = vunpack.c.l.b16 %v87
  %v225 = vunpack.c.l.b16 %v88
  %v226 = vunpack.c.l.b16 %v89
  %v227 = vunpack.c.l.b16 %v90
  %v228 = vunpack.c.l.b16 %v91
  %v229 = vunpack.c.l.b16 %v92
  %v230 = vunpack.c.l.b16 %v93
  %v231 = vunpack.c.l.b16 %v94
  %v232 = vunpack.c.l.b16 %v95
  %v233 = vunpack.c.l.b16 %v96
  %v234 = vunpack.c.l.b16 %v97
  %v235 = vunpack.c.l.b16 %v98
  %v236 = vunpack.c.l.b16 %v99
  %v237 = vunpack.c.l.b16 %v100
  %v238 = vunpack.c.l.b16 %v101
  %v239 = vunpack.c.l.b16 %v102
  %v240 = vunpack.c.l.b16 %v103
  %v241 = vunpack.c.l.b16 %v104
  %v242 = vunpack.c.l.b16 %v105
  %v243 = vunpack.c.l.b16 %v106
  %v244 = vunpack.c.l.b16 %v107
  %v245 = vunpack.c.l.b16 %v108
  %v246 = vunpack.c.l.b16 %v109
  %v247 = vunpack.c.l.b16 %v110
  %v248 = vunpack.c.l.b16 %v111
  %v249 = vunpack.c.l.b16 %v112
  %v250 = vunpack.c.l.b16 %v113
  %v251 = vunpack.c.l.b16 %v114
  %v252 = vpack.c.b16 %v188, %v187
  %v253 = vpack.c.b16 %v190, %v189
  %v254 = vpack.c.b16 %v192, %v191
  %v255 = vpack.c.b16 %v194, %v193
  %v256 = vpack.c.b16 %v196, %v195
  %v257 = vpack.c.b16 %v198, %v197
  %v258 = vpack.c.b16 %v200, %v199
  %v259 = vpack.c.b16 %v202, %v201
  %v260 = vpack.c.b16 %v204, %v203
  %v261 = vpack.c.b16 %v206, %v205
  %v262 = vpack.c.b16 %v208, %v207
  %v263 = vpack.c.b16 %v210, %v209
  %v264 = vpack.c.b16 %v212, %v211
  %v265 = vpack.c.b16 %v214, %v213
  %v266 = vpack.c.b16 %v216, %v215
  %v267 = vpack.c.b16 %v218, %v217
  %v268 = vpack.c.b16 %v220, %v219
  %v269 = vpack.c.b16 %v222, %v221
  %v270 = vpack.c.b16 %v224, %v223
  %v271 = vpack.c.b16 %v226, %v225
  %v272 = vpack.c.b16 %v228, %v227
  %v273 = vpack.c.b16 %v230, %v229
  %v274 = vpack.c.b16 %v232, %v231
  %v275 = vpack.c.b16 %v234, %v233
  %v276 = vpack.c.b16 %v236, %v235
  %v277 = vpack.c.b16 %v238, %v237
  %v278 = vpack.c.b16 %v240, %v239
  %v279 = vpack.c.b16 %v242, %v241
  %v280 = vpack.c.b16 %v244, %v243
  %v281 = vpack.c.b16 %v246, %v245
  %v282 = vpack.c.b16 %v248, %v247
  %v283 = vpack.c.b16 %v250, %v249
  %v284 = vpack.c.b16 %v251, %v251
  %vm317 = vcmask 31744
  %v319 = vsel %vm317, %v49, 0
  %vm321 = vcmask 1041408
  %v323 = vsel %vm321, %v284, 0
  %325 = vmatprep.subr.bf16.mxu0 0
  %326 = vmatpush1.bf16.msra.mxu0 %v252
  %327 = vmatprep.subr.bf16.mxu0 0
  %328 = vmatpush1.bf16.msra.mxu0 %v253
  %329 = vmatprep.subr.bf16.mxu0 0
  %330 = vmatpush1.bf16.msra.mxu0 %v254
  %331 = vmatprep.subr.bf16.mxu0 0
  %332 = vmatpush1.bf16.msra.mxu0 %v255
  %333 = vmatprep.subr.bf16.mxu0 0
  %334 = vmatpush1.bf16.msra.mxu0 %v256
  %335 = vmatprep.subr.bf16.mxu0 0
  %336 = vmatpush1.bf16.msra.mxu0 %v257
  %337 = vmatprep.subr.bf16.mxu0 0
  %338 = vmatpush1.bf16.msra.mxu0 %v258
  %339 = vmatprep.subr.bf16.mxu0 0
  %340 = vmatpush1.bf16.msra.mxu0 %v259
  %341 = vmatprep.subr.bf16.mxu0 0
  %342 = vmatpush1.bf16.msra.mxu0 %v260
  %343 = vmatprep.subr.bf16.mxu0 0
  %344 = vmatpush1.bf16.msra.mxu0 %v261
  %345 = vmatprep.subr.bf16.mxu0 0
  %346 = vmatpush1.bf16.msra.mxu0 %v262
  %347 = vmatprep.subr.bf16.mxu0 0
  %348 = vmatpush1.bf16.msra.mxu0 %v263
  %349 = vmatprep.subr.bf16.mxu0 0
  %350 = vmatpush1.bf16.msra.mxu0 %v264
  %351 = vmatprep.subr.bf16.mxu0 0
  %352 = vmatpush1.bf16.msra.mxu0 %v265
  %353 = vmatprep.subr.bf16.mxu0 0
  %354 = vmatpush1.bf16.msra.mxu0 %v266
  %355 = vmatprep.subr.bf16.mxu0 0
  %356 = vmatpush1.bf16.msra.mxu0 %v267
  %357 = vmatprep.mubr.bf16.mxu0 %v46
  %358 = vmatmul.mubr.bf16.gmra.mrb[0].mxu0 %v45
  %v359 = vpop.f32.mrb[0].mxu0
  %v360 = vadd.f32 %v120, %v359
  %v361 = vpop.f32.mrb[0].mxu0
  %v362 = vpop.f32.mrb[0].mxu0
  %v363 = vadd.f32 %v120, %v362
  %v364 = vpop.f32.mrb[0].mxu0
  %365 = vdwg.mxu0
  %366 = vmatprep.subr.bf16.mxu0 0
  %367 = vmatpush1.bf16.msra.mxu0 %v268
  %368 = vmatprep.subr.bf16.mxu0 0
  %369 = vmatpush1.bf16.msra.mxu0 %v269
  %370 = vmatprep.subr.bf16.mxu0 0
  %371 = vmatpush1.bf16.msra.mxu0 %v270
  %372 = vmatprep.subr.bf16.mxu0 0
  %373 = vmatpush1.bf16.msra.mxu0 %v271
  %374 = vmatprep.subr.bf16.mxu0 0
  %375 = vmatpush1.bf16.msra.mxu0 %v272
  %376 = vmatprep.subr.bf16.mxu0 0
  %377 = vmatpush1.bf16.msra.mxu0 %v273
  %378 = vmatprep.subr.bf16.mxu0 0
  %379 = vmatpush1.bf16.msra.mxu0 %v274
  %380 = vmatprep.subr.bf16.mxu0 0
  %381 = vmatpush1.bf16.msra.mxu0 %v275
  %382 = vmatprep.subr.bf16.mxu0 0
  %383 = vmatpush1.bf16.msra.mxu0 %v276
  %384 = vmatprep.subr.bf16.mxu0 0
  %385 = vmatpush1.bf16.msra.mxu0 %v277
  %386 = vmatprep.subr.bf16.mxu0 0
  %387 = vmatpush1.bf16.msra.mxu0 %v278
  %388 = vmatprep.subr.bf16.mxu0 0
  %389 = vmatpush1.bf16.msra.mxu0 %v279
  %390 = vmatprep.subr.bf16.mxu0 0
  %391 = vmatpush1.bf16.msra.mxu0 %v280
  %392 = vmatprep.subr.bf16.mxu0 0
  %393 = vmatpush1.bf16.msra.mxu0 %v281
  %394 = vmatprep.subr.bf16.mxu0 0
  %395 = vmatpush1.bf16.msra.mxu0 %v282
  %396 = vmatprep.subr.bf16.mxu0 0
  %397 = vmatpush1.bf16.msra.mxu0 %v283
  %398 = vmatprep.mubr.bf16.mxu0 %v48
  %399 = vmatmul.mubr.bf16.gmra.mrb[0].mxu0 %v47
  %v400 = vpop.f32.mrb[0].mxu0
  %v401 = vadd.f32 %v360, %v400
  %v402 = vpop.f32.mrb[0].mxu0
  %v403 = vpop.f32.mrb[0].mxu0
  %v404 = vadd.f32 %v363, %v403
  %v405 = vpop.f32.mrb[0].mxu0
  %406 = vdwg.mxu0
  %407 = vmatprep.subr.bf16.mxu0 0
  %408 = vmatpush1.bf16.msra.mxu0 %v323
  %409 = vmatprep.subr.bf16.mxu0 0
  %410 = vmatpush1.bf16.msra.mxu0 0
  %411 = vmatprep.subr.bf16.mxu0 0
  %412 = vmatpush1.bf16.msra.mxu0 0
  %413 = vmatprep.subr.bf16.mxu0 0
  %414 = vmatpush1.bf16.msra.mxu0 0
  %415 = vmatprep.subr.bf16.mxu0 0
  %416 = vmatpush1.bf16.msra.mxu0 0
  %417 = vmatprep.subr.bf16.mxu0 0
  %418 = vmatpush1.bf16.msra.mxu0 0
  %419 = vmatprep.subr.bf16.mxu0 0
  %420 = vmatpush1.bf16.msra.mxu0 0
  %421 = vmatprep.subr.bf16.mxu0 0
  %422 = vmatpush1.bf16.msra.mxu0 0
  %423 = vmatprep.subr.bf16.mxu0 0
  %424 = vmatpush1.bf16.msra.mxu0 0
  %425 = vmatprep.subr.bf16.mxu0 0
  %426 = vmatpush1.bf16.msra.mxu0 0
  %427 = vmatprep.subr.bf16.mxu0 0
  %428 = vmatpush1.bf16.msra.mxu0 0
  %429 = vmatprep.subr.bf16.mxu0 0
  %430 = vmatpush1.bf16.msra.mxu0 0
  %431 = vmatprep.subr.bf16.mxu0 0
  %432 = vmatpush1.bf16.msra.mxu0 0
  %433 = vmatprep.subr.bf16.mxu0 0
  %434 = vmatpush1.bf16.msra.mxu0 0
  %435 = vmatprep.subr.bf16.mxu0 0
  %436 = vmatpush1.bf16.msra.mxu0 0
  %437 = vmatprep.subr.bf16.mxu0 0
  %438 = vmatpush1.bf16.msra.mxu0 0
  %439 = vmatprep.mubr.bf16.mxu0 0
  %440 = vmatmul.mubr.bf16.gmra.mrb[0].mxu0 %v319
  %v441 = vpop.f32.mrb[0].mxu0
  %v442 = vadd.f32 %v401, %v441
  %v443 = vpop.f32.mrb[0].mxu0
  %v444 = vpop.f32.mrb[0].mxu0
  %v445 = vadd.f32 %v404, %v444
  %v446 = vpop.f32.mrb[0].mxu0
  %447 = vdwg.mxu0
  %v448 = vmax.f32 %v442, 0.0
  %v449 = vmax.f32 %v445, 0.0
  %v450 = vpack.c.bf16 %v449, %v448
  %v451 = vld [vmem:[%s3] sm:$0xf]
  %v452 = vld [vmem:[%s3 + $0x4] sm:$0xf]
  %v453 = vld [vmem:[%s4] sm:$0x1]
  %v455 = vlaneseq
  %v456 = vshrl.u32 %v455, 7
  %v457 = vsub.s32 0, %v456
  %v458 = vrot.slane %v453, %v457
  %v462 = vunpack.c.l.b16 %v451
  %v463 = vunpack.c.l.b16 %v452
  %v464 = vpack.c.b16 %v463, %v462
  %vm465 = vcmask 121856
  %v467 = vsel %vm465, %v450, 0
  %vm469 = vcmask 1046528
  %vm470 = vcmask 1047552
  %v471 = vsel %vm469, 4294967295, 65535
  %v472 = vsel %vm470, %v471, 0
  %v474 = vand.u32 %v464, %v472
  %476 = vmatprep.subr.bf16.mxu0 0
  %477 = vmatpush1.bf16.msra.mxu0 %v474
  %478 = vmatprep.subr.bf16.mxu0 0
  %479 = vmatpush1.bf16.msra.mxu0 0
  %480 = vmatprep.subr.bf16.mxu0 0
  %481 = vmatpush1.bf16.msra.mxu0 0
  %482 = vmatprep.subr.bf16.mxu0 0
  %483 = vmatpush1.bf16.msra.mxu0 0
  %484 = vmatprep.subr.bf16.mxu0 0
  %485 = vmatpush1.bf16.msra.mxu0 0
  %486 = vmatprep.subr.bf16.mxu0 0
  %487 = vmatpush1.bf16.msra.mxu0 0
  %488 = vmatprep.subr.bf16.mxu0 0
  %489 = vmatpush1.bf16.msra.mxu0 0
  %490 = vmatprep.subr.bf16.mxu0 0
  %491 = vmatpush1.bf16.msra.mxu0 0
  %492 = vmatprep.subr.bf16.mxu0 0
  %493 = vmatpush1.bf16.msra.mxu0 0
  %494 = vmatprep.subr.bf16.mxu0 0
  %495 = vmatpush1.bf16.msra.mxu0 0
  %496 = vmatprep.subr.bf16.mxu0 0
  %497 = vmatpush1.bf16.msra.mxu0 0
  %498 = vmatprep.subr.bf16.mxu0 0
  %499 = vmatpush1.bf16.msra.mxu0 0
  %500 = vmatprep.subr.bf16.mxu0 0
  %501 = vmatpush1.bf16.msra.mxu0 0
  %502 = vmatprep.subr.bf16.mxu0 0
  %503 = vmatpush1.bf16.msra.mxu0 0
  %504 = vmatprep.subr.bf16.mxu0 0
  %505 = vmatpush1.bf16.msra.mxu0 0
  %506 = vmatprep.subr.bf16.mxu0 0
  %507 = vmatpush1.bf16.msra.mxu0 0
  %508 = vmatprep.mubr.bf16.mxu0 0
  %509 = vmatmul.mubr.bf16.gmra.mrb[0].mxu0 %v467
  %v510 = vpop.f32.mrb[0].mxu0
  %v511 = vadd.f32 %v458, %v510
  %v512 = vpop.f32.mrb[0].mxu0
  %v513 = vpop.f32.mrb[0].mxu0
  %v514 = vadd.f32 %v458, %v513
  %v515 = vpop.f32.mrb[0].mxu0
  %516 = vdwg.mxu0
  %v517 = vmax.f32 %v511, 0.0
  %v518 = vmax.f32 %v514, 0.0
  %v519 = vpack.c.bf16 %v518, %v517
  %v520 = vld [vmem:[%s5] sm:$0xf]
  %v521 = vld [vmem:[%s5 + $0x4] sm:$0xf]
  %v522 = vld [vmem:[%s6] sm:$0x1]
  %v524 = vlaneseq
  %v525 = vshrl.u32 %v524, 7
  %v526 = vsub.s32 0, %v525
  %v527 = vrot.slane %v522, %v526
  %v531 = vunpack.c.l.b16 %v520
  %v532 = vunpack.c.l.b16 %v521
  %v533 = vpack.c.b16 %v532, %v531
  %v535 = vsel %vm465, %v519, 0
  %v538 = vand.u32 %v533, %v472
  %540 = vmatprep.subr.bf16.mxu0 0
  %541 = vmatpush1.bf16.msra.mxu0 %v538
  %542 = vmatprep.subr.bf16.mxu0 0
  %543 = vmatpush1.bf16.msra.mxu0 0
  %544 = vmatprep.subr.bf16.mxu0 0
  %545 = vmatpush1.bf16.msra.mxu0 0
  %546 = vmatprep.subr.bf16.mxu0 0
  %547 = vmatpush1.bf16.msra.mxu0 0
  %548 = vmatprep.subr.bf16.mxu0 0
  %549 = vmatpush1.bf16.msra.mxu0 0
  %550 = vmatprep.subr.bf16.mxu0 0
  %551 = vmatpush1.bf16.msra.mxu0 0
  %552 = vmatprep.subr.bf16.mxu0 0
  %553 = vmatpush1.bf16.msra.mxu0 0
  %554 = vmatprep.subr.bf16.mxu0 0
  %555 = vmatpush1.bf16.msra.mxu0 0
  %556 = vmatprep.subr.bf16.mxu0 0
  %557 = vmatpush1.bf16.msra.mxu0 0
  %558 = vmatprep.subr.bf16.mxu0 0
  %559 = vmatpush1.bf16.msra.mxu0 0
  %560 = vmatprep.subr.bf16.mxu0 0
  %561 = vmatpush1.bf16.msra.mxu0 0
  %562 = vmatprep.subr.bf16.mxu0 0
  %563 = vmatpush1.bf16.msra.mxu0 0
  %564 = vmatprep.subr.bf16.mxu0 0
  %565 = vmatpush1.bf16.msra.mxu0 0
  %566 = vmatprep.subr.bf16.mxu0 0
  %567 = vmatpush1.bf16.msra.mxu0 0
  %568 = vmatprep.subr.bf16.mxu0 0
  %569 = vmatpush1.bf16.msra.mxu0 0
  %570 = vmatprep.subr.bf16.mxu0 0
  %571 = vmatpush1.bf16.msra.mxu0 0
  %572 = vmatprep.mubr.bf16.mxu0 0
  %573 = vmatmul.mubr.bf16.gmra.mrb[0].mxu0 %v535
  %v574 = vpop.f32.mrb[0].mxu0
  %v575 = vadd.f32 %v527, %v574
  %v576 = vpop.f32.mrb[0].mxu0
  %v577 = vpop.f32.mrb[0].mxu0
  %v578 = vadd.f32 %v527, %v577
  %v579 = vpop.f32.mrb[0].mxu0
  %580 = vdwg.mxu0
  %v581 = vmax.f32 %v575, 0.0
  %v582 = vmax.f32 %v578, 0.0
  %v583 = vpack.c.bf16 %v582, %v581
  %v584 = vld [vmem:[%s7] sm:$0xf]
  %v585 = vld [vmem:[%s7 + $0x4] sm:$0xf]
  %v586 = vld [vmem:[#allocation2] sm:$0x1]
  %v588 = vlaneseq
  %v589 = vshrl.u32 %v588, 7
  %v590 = vsub.s32 0, %v589
  %v591 = vrot.slane %v586, %v590
  %v595 = vunpack.c.l.b16 %v584
  %v596 = vunpack.c.l.b16 %v585
  %v597 = vpack.c.b16 %v596, %v595
  %v599 = vsel %vm465, %v583, 0
  %v602 = vand.u32 %v597, %v472
  %604 = vmatprep.subr.bf16.mxu0 0
  %605 = vmatpush1.bf16.msra.mxu0 %v602
  %606 = vmatprep.subr.bf16.mxu0 0
  %607 = vmatpush1.bf16.msra.mxu0 0
  %608 = vmatprep.subr.bf16.mxu0 0
  %609 = vmatpush1.bf16.msra.mxu0 0
  %610 = vmatprep.subr.bf16.mxu0 0
  %611 = vmatpush1.bf16.msra.mxu0 0
  %612 = vmatprep.subr.bf16.mxu0 0
  %613 = vmatpush1.bf16.msra.mxu0 0
  %614 = vmatprep.subr.bf16.mxu0 0
  %615 = vmatpush1.bf16.msra.mxu0 0
  %616 = vmatprep.subr.bf16.mxu0 0
  %617 = vmatpush1.bf16.msra.mxu0 0
  %618 = vmatprep.subr.bf16.mxu0 0
  %619 = vmatpush1.bf16.msra.mxu0 0
  %620 = vmatprep.subr.bf16.mxu0 0
  %621 = vmatpush1.bf16.msra.mxu0 0
  %622 = vmatprep.subr.bf16.mxu0 0
  %623 = vmatpush1.bf16.msra.mxu0 0
  %624 = vmatprep.subr.bf16.mxu0 0
  %625 = vmatpush1.bf16.msra.mxu0 0
  %626 = vmatprep.subr.bf16.mxu0 0
  %627 = vmatpush1.bf16.msra.mxu0 0
  %628 = vmatprep.subr.bf16.mxu0 0
  %629 = vmatpush1.bf16.msra.mxu0 0
  %630 = vmatprep.subr.bf16.mxu0 0
  %631 = vmatpush1.bf16.msra.mxu0 0
  %632 = vmatprep.subr.bf16.mxu0 0
  %633 = vmatpush1.bf16.msra.mxu0 0
  %634 = vmatprep.subr.bf16.mxu0 0
  %635 = vmatpush1.bf16.msra.mxu0 0
  %636 = vmatprep.mubr.bf16.mxu0 0
  %637 = vmatmul.mubr.bf16.gmra.mrb[0].mxu0 %v599
  %v638 = vpop.f32.mrb[0].mxu0
  %v639 = vadd.f32 %v591, %v638
  %v640 = vpop.f32.mrb[0].mxu0
  %v641 = vpop.f32.mrb[0].mxu0
  %v642 = vadd.f32 %v591, %v641
  %v643 = vpop.f32.mrb[0].mxu0
  %644 = vdwg.mxu0
  %vm645 = vcmask 7168
  %646 = vst.msk [vmem:[%s9] sm:$0xff] %vm645, %v639
  %647 = vst.msk [vmem:[%s9 + $0x8] sm:$0xff] %vm645, %v642
  // Predicated region
  $region38: #{tpu_custom_call.1} parent=0 // pred_check
    _
  $region39: #{tpu_custom_call.1} parent=0 // pred_check_branch
    %649 = sbr.rel (0) target = $region41
  $region40: #{tpu_custom_call.1} parent=0 // pred_region
    _
  $region41: #{tpu_custom_call.1} parent=0 // pred_fallthru
    _
  // Predicated region
  $region42: #{tpu_custom_call.1} parent=0 // pred_check
    _
  $region43: #{tpu_custom_call.1} parent=0 // pred_check_branch
    %651 = sbr.rel (0) target = $region45
  $region44: #{tpu_custom_call.1} parent=0 // pred_region
    _
  $region45: #{tpu_custom_call.1} parent=0 // pred_fallthru
    _

</llo_original>
